<compile_context>
chip_gen: v6e
topology: v6e:2x2x1
jax: 0.10.0
libtpu: 0.0.40
codegen_flags: <defaults>
</compile_context>

<pallas_src>
import jax
import jax.numpy as jnp
from jax import lax
from jax.experimental import pallas as pl
from jax.experimental.pallas import tpu as pltpu


def _discriminator_kernel(gates_pre_ref,  # [T, B, 4H] f32  (x @ W_ih^T + b, gate order i,f,o,g)
                          whh_t_ref,      # [H, 4H]    f32  (W_hh^T, gate order i,f,o,g)
                          addn_ref,       # [B, A]     f32
                          wh_ref,         # [H, 1]     f32  (linear weight, hidden part)
                          wa_ref,         # [A, 1]     f32  (linear weight, addn-feat part)
                          lb_ref,         # [1, 1]     f32  (linear bias)
                          out_ref):       # [B, 1]     f32
    T, B, _ = gates_pre_ref.shape
    H = whh_t_ref.shape[0]

    def step(t, carry):
        h, c = carry
        # Single recurrent matmul per step; input projection + bias were folded
        # into gates_pre in the wrapper.
        gates = gates_pre_ref[t] + jnp.dot(h, whh_t_ref[...],
                                           preferred_element_type=jnp.float32)  # [B, 4H]
        # Gate order (i, f, o, g): one sigmoid over the first 3H columns,
        # one tanh over the last H columns.
        sig = jax.nn.sigmoid(gates[:, :3 * H])
        i_g = sig[:, 0 * H:1 * H]
        f_g = sig[:, 1 * H:2 * H]
        o_g = sig[:, 2 * H:3 * H]
        g_g = jnp.tanh(gates[:, 3 * H:4 * H])
        c_new = f_g * c + i_g * g_g
        h_new = o_g * jnp.tanh(c_new)
        return (h_new, c_new)

    h0 = jnp.zeros((B, H), jnp.float32)
    c0 = jnp.zeros((B, H), jnp.float32)
    # Fully unroll the short, fixed-length recurrence (state stays in vregs).
    h, _ = lax.fori_loop(0, T, step, (h0, c0), unroll=True)

    # hidden2label: Linear(H + A, 1) on concat(h_last, addn_feats), then Sigmoid.
    # The concat + matmul is split into two matmuls (mathematically identical).
    logit = (jnp.dot(h, wh_ref[...], preferred_element_type=jnp.float32)
             + jnp.dot(addn_ref[...], wa_ref[...], preferred_element_type=jnp.float32)
             + lb_ref[...])                                                     # [B, 1]
    out_ref[...] = jax.nn.sigmoid(logit)


def discriminator_forward(tokens, addn_feats, params):
    """tokens: [T, B] int32, addn_feats: [B, A] f32 -> [B, 1] f32 in (0, 1)."""
    H = params["w_hh"].shape[1]

    # Permute PyTorch gate blocks (i, f, g, o) -> (i, f, o, g) so the three
    # sigmoid gates are contiguous inside the kernel.
    def permute_gates(m):  # m: [4H, ...] or [4H]
        return jnp.concatenate(
            [m[0 * H:1 * H], m[1 * H:2 * H], m[3 * H:4 * H], m[2 * H:3 * H]], axis=0)

    w_ih_p = permute_gates(params["w_ih"])                        # [4H, E]
    w_hh_p = permute_gates(params["w_hh"])                        # [4H, H]
    bias_p = permute_gates(params["b_ih"] + params["b_hh"])       # [4H]

    # Fold the input projection + bias into the embedding table (one-time XLA
    # matmul over the vocab), then gather per-token pre-activations.
    proj_table = params["embedding"] @ w_ih_p.T + bias_p[None, :]  # [vocab, 4H]
    gates_pre = proj_table[tokens].astype(jnp.float32)             # [T, B, 4H]

    whh_t = w_hh_p.T                                               # [H, 4H]
    # nn.Linear(H + A, 1): weight [1, H+A], bias [1] -> split for concat-free head.
    w_lin = params["lin_w"]
    wh = w_lin[:, :H].T                                            # [H, 1]
    wa = w_lin[:, H:].T                                            # [A, 1]
    lb = params["lin_b"].reshape(1, 1)                             # [1, 1]

    T, B, _ = gates_pre.shape
    vmem = pl.BlockSpec(memory_space=pltpu.MemorySpace.VMEM)
    return pl.pallas_call(
        _discriminator_kernel,
        out_shape=jax.ShapeDtypeStruct((B, 1), jnp.float32),
        in_specs=[vmem] * 6,
        out_specs=vmem,
    )(gates_pre, whh_t, addn_feats, wh, wa, lb)


def _reference_forward(tokens, addn_feats, params):
    """Pure-JAX reference (mirrors PyTorch semantics) for validation."""
    emb = params["embedding"][tokens].astype(jnp.float32)  # [T, B, E]
    T, B, _ = emb.shape
    H = params["w_hh"].shape[1]
    h = jnp.zeros((B, H), jnp.float32)
    c = jnp.zeros((B, H), jnp.float32)
    for t in range(T):
        gates = (emb[t] @ params["w_ih"].T + h @ params["w_hh"].T
                 + params["b_ih"] + params["b_hh"])
        i = jax.nn.sigmoid(gates[:, 0 * H:1 * H])
        f = jax.nn.sigmoid(gates[:, 1 * H:2 * H])
        g = jnp.tanh(gates[:, 2 * H:3 * H])
        o = jax.nn.sigmoid(gates[:, 3 * H:4 * H])
        c = f * c + i * g
        h = o * jnp.tanh(c)
    feat = jnp.concatenate([h, addn_feats], axis=1)
    return jax.nn.sigmoid(feat @ params["lin_w"].T + params["lin_b"])


def make_params(key, vocab_size, embedding_size, hidden_dim, num_addn_feat):
    ks = jax.random.split(key, 7)
    scale = 0.1
    return {
        "embedding": scale * jax.random.normal(ks[0], (vocab_size, embedding_size), jnp.float32),
        "w_ih": scale * jax.random.normal(ks[1], (4 * hidden_dim, embedding_size), jnp.float32),
        "w_hh": scale * jax.random.normal(ks[2], (4 * hidden_dim, hidden_dim), jnp.float32),
        "b_ih": scale * jax.random.normal(ks[3], (4 * hidden_dim,), jnp.float32),
        "b_hh": scale * jax.random.normal(ks[4], (4 * hidden_dim,), jnp.float32),
        "lin_w": scale * jax.random.normal(ks[5], (1, hidden_dim + num_addn_feat), jnp.float32),
        "lin_b": scale * jax.random.normal(ks[6], (1,), jnp.float32),
    }


if __name__ == "__main__":
    # Small shapes implied by the module: seq=8, batch=8 (fills vreg sublanes),
    # embedding=16, hidden=32 (4H = 128 -> lane-dense gate tiles), addn_feat=3.
    SEQ, BATCH, VOCAB, EMB, HID, ADDN = 8, 8, 50, 16, 32, 3

    key = jax.random.PRNGKey(0)
    k_tok, k_addn, k_param = jax.random.split(key, 3)

    tokens = jax.random.randint(k_tok, (SEQ, BATCH), 0, VOCAB, dtype=jnp.int32)
    addn_feats = jax.random.normal(k_addn, (BATCH, ADDN), jnp.float32)
    params = make_params(k_param, VOCAB, EMB, HID, ADDN)

    out = discriminator_forward(tokens, addn_feats, params)
    out = jax.block_until_ready(out)

    ref = _reference_forward(tokens, addn_feats, params)
    assert out.shape == (BATCH, 1)
    assert jnp.allclose(out, ref, atol=1e-5, rtol=1e-5), (out, ref)

    print("KERNEL_OK")
</pallas_src>

<mosaic_0001>
module attributes {stable_mosaic.version = 11 : i64} {
  func.func @_discriminator_kernel(%arg0: memref<8x8x128xf32, #tpu.memory_space<vmem>>, %arg1: memref<32x128xf32, #tpu.memory_space<vmem>>, %arg2: memref<8x3xf32, #tpu.memory_space<vmem>>, %arg3: memref<32x1xf32, #tpu.memory_space<vmem>>, %arg4: memref<3x1xf32, #tpu.memory_space<vmem>>, %arg5: memref<1x1xf32, #tpu.memory_space<vmem>>, %arg6: memref<8x1xf32, #tpu.memory_space<vmem>>) attributes {dimension_semantics = [], scalar_prefetch = 0 : i64, scratch_operands = 0 : i64, tpu.core_type = #tpu.core_type<tc>} {
    %cst = arith.constant 0.000000e+00 : f32
    %0 = vector.broadcast %cst : f32 to vector<8x32xf32>
    %cst_0 = arith.constant 0.000000e+00 : f32
    %1 = vector.broadcast %cst_0 : f32 to vector<8x32xf32>
    %c0_i32 = arith.constant 0 : i32
    %2 = arith.index_cast %c0_i32 : i32 to index
    %c0 = arith.constant 0 : index
    %c0_1 = arith.constant 0 : index
    %3 = vector.load %arg0[%2, %c0, %c0_1] : memref<8x8x128xf32, #tpu.memory_space<vmem>>, vector<1x8x128xf32>
    %4 = vector.shape_cast %3 : vector<1x8x128xf32> to vector<8x128xf32>
    %c0_2 = arith.constant 0 : index
    %c0_3 = arith.constant 0 : index
    %5 = vector.load %arg1[%c0_2, %c0_3] : memref<32x128xf32, #tpu.memory_space<vmem>>, vector<32x128xf32>
    %cst_4 = arith.constant dense<0.000000e+00> : vector<8x128xf32>
    %6 = tpu.matmul %0, %5, %cst_4 {dimension_numbers = #tpu.dot_dimension_numbers<[1], [0], [0], [1], [0, 0, 1, 1], [], []>} : vector<8x32xf32>, vector<32x128xf32>, vector<8x128xf32> -> vector<8x128xf32>
    %7 = arith.addf %4, %6 : vector<8x128xf32>
    %8 = vector.extract_strided_slice %7 {offsets = [0, 0], sizes = [8, 96], strides = [1, 1]} : vector<8x128xf32> to vector<8x96xf32>
    %9 = arith.negf %8 : vector<8x96xf32>
    %10 = math.exp %9 : vector<8x96xf32>
    %cst_5 = arith.constant 1.000000e+00 : f32
    %11 = vector.broadcast %cst_5 : f32 to vector<8x96xf32>
    %12 = arith.addf %11, %10 : vector<8x96xf32>
    %13 = arith.divf %11, %12 : vector<8x96xf32>
    %14 = vector.extract_strided_slice %13 {offsets = [0, 0], sizes = [8, 32], strides = [1, 1]} : vector<8x96xf32> to vector<8x32xf32>
    %15 = vector.extract_strided_slice %13 {offsets = [0, 32], sizes = [8, 32], strides = [1, 1]} : vector<8x96xf32> to vector<8x32xf32>
    %16 = vector.extract_strided_slice %13 {offsets = [0, 64], sizes = [8, 32], strides = [1, 1]} : vector<8x96xf32> to vector<8x32xf32>
    %17 = vector.extract_strided_slice %7 {offsets = [0, 96], sizes = [8, 32], strides = [1, 1]} : vector<8x128xf32> to vector<8x32xf32>
    %18 = math.tanh %17 : vector<8x32xf32>
    %19 = arith.mulf %15, %1 : vector<8x32xf32>
    %20 = arith.mulf %14, %18 : vector<8x32xf32>
    %21 = arith.addf %19, %20 : vector<8x32xf32>
    %22 = math.tanh %21 : vector<8x32xf32>
    %23 = arith.mulf %16, %22 : vector<8x32xf32>
    %c1_i32 = arith.constant 1 : i32
    %24 = arith.index_cast %c1_i32 : i32 to index
    %c0_6 = arith.constant 0 : index
    %c0_7 = arith.constant 0 : index
    %25 = vector.load %arg0[%24, %c0_6, %c0_7] : memref<8x8x128xf32, #tpu.memory_space<vmem>>, vector<1x8x128xf32>
    %26 = vector.shape_cast %25 : vector<1x8x128xf32> to vector<8x128xf32>
    %c0_8 = arith.constant 0 : index
    %c0_9 = arith.constant 0 : index
    %27 = vector.load %arg1[%c0_8, %c0_9] : memref<32x128xf32, #tpu.memory_space<vmem>>, vector<32x128xf32>
    %cst_10 = arith.constant dense<0.000000e+00> : vector<8x128xf32>
    %28 = tpu.matmul %23, %27, %cst_10 {dimension_numbers = #tpu.dot_dimension_numbers<[1], [0], [0], [1], [0, 0, 1, 1], [], []>} : vector<8x32xf32>, vector<32x128xf32>, vector<8x128xf32> -> vector<8x128xf32>
    %29 = arith.addf %26, %28 : vector<8x128xf32>
    %30 = vector.extract_strided_slice %29 {offsets = [0, 0], sizes = [8, 96], strides = [1, 1]} : vector<8x128xf32> to vector<8x96xf32>
    %31 = arith.negf %30 : vector<8x96xf32>
    %32 = math.exp %31 : vector<8x96xf32>
    %cst_11 = arith.constant 1.000000e+00 : f32
    %33 = vector.broadcast %cst_11 : f32 to vector<8x96xf32>
    %34 = arith.addf %33, %32 : vector<8x96xf32>
    %35 = arith.divf %33, %34 : vector<8x96xf32>
    %36 = vector.extract_strided_slice %35 {offsets = [0, 0], sizes = [8, 32], strides = [1, 1]} : vector<8x96xf32> to vector<8x32xf32>
    %37 = vector.extract_strided_slice %35 {offsets = [0, 32], sizes = [8, 32], strides = [1, 1]} : vector<8x96xf32> to vector<8x32xf32>
    %38 = vector.extract_strided_slice %35 {offsets = [0, 64], sizes = [8, 32], strides = [1, 1]} : vector<8x96xf32> to vector<8x32xf32>
    %39 = vector.extract_strided_slice %29 {offsets = [0, 96], sizes = [8, 32], strides = [1, 1]} : vector<8x128xf32> to vector<8x32xf32>
    %40 = math.tanh %39 : vector<8x32xf32>
    %41 = arith.mulf %37, %21 : vector<8x32xf32>
    %42 = arith.mulf %36, %40 : vector<8x32xf32>
    %43 = arith.addf %41, %42 : vector<8x32xf32>
    %44 = math.tanh %43 : vector<8x32xf32>
    %45 = arith.mulf %38, %44 : vector<8x32xf32>
    %c2_i32 = arith.constant 2 : i32
    %46 = arith.index_cast %c2_i32 : i32 to index
    %c0_12 = arith.constant 0 : index
    %c0_13 = arith.constant 0 : index
    %47 = vector.load %arg0[%46, %c0_12, %c0_13] : memref<8x8x128xf32, #tpu.memory_space<vmem>>, vector<1x8x128xf32>
    %48 = vector.shape_cast %47 : vector<1x8x128xf32> to vector<8x128xf32>
    %c0_14 = arith.constant 0 : index
    %c0_15 = arith.constant 0 : index
    %49 = vector.load %arg1[%c0_14, %c0_15] : memref<32x128xf32, #tpu.memory_space<vmem>>, vector<32x128xf32>
    %cst_16 = arith.constant dense<0.000000e+00> : vector<8x128xf32>
    %50 = tpu.matmul %45, %49, %cst_16 {dimension_numbers = #tpu.dot_dimension_numbers<[1], [0], [0], [1], [0, 0, 1, 1], [], []>} : vector<8x32xf32>, vector<32x128xf32>, vector<8x128xf32> -> vector<8x128xf32>
    %51 = arith.addf %48, %50 : vector<8x128xf32>
    %52 = vector.extract_strided_slice %51 {offsets = [0, 0], sizes = [8, 96], strides = [1, 1]} : vector<8x128xf32> to vector<8x96xf32>
    %53 = arith.negf %52 : vector<8x96xf32>
    %54 = math.exp %53 : vector<8x96xf32>
    %cst_17 = arith.constant 1.000000e+00 : f32
    %55 = vector.broadcast %cst_17 : f32 to vector<8x96xf32>
    %56 = arith.addf %55, %54 : vector<8x96xf32>
    %57 = arith.divf %55, %56 : vector<8x96xf32>
    %58 = vector.extract_strided_slice %57 {offsets = [0, 0], sizes = [8, 32], strides = [1, 1]} : vector<8x96xf32> to vector<8x32xf32>
    %59 = vector.extract_strided_slice %57 {offsets = [0, 32], sizes = [8, 32], strides = [1, 1]} : vector<8x96xf32> to vector<8x32xf32>
    %60 = vector.extract_strided_slice %57 {offsets = [0, 64], sizes = [8, 32], strides = [1, 1]} : vector<8x96xf32> to vector<8x32xf32>
    %61 = vector.extract_strided_slice %51 {offsets = [0, 96], sizes = [8, 32], strides = [1, 1]} : vector<8x128xf32> to vector<8x32xf32>
    %62 = math.tanh %61 : vector<8x32xf32>
    %63 = arith.mulf %59, %43 : vector<8x32xf32>
    %64 = arith.mulf %58, %62 : vector<8x32xf32>
    %65 = arith.addf %63, %64 : vector<8x32xf32>
    %66 = math.tanh %65 : vector<8x32xf32>
    %67 = arith.mulf %60, %66 : vector<8x32xf32>
    %c3_i32 = arith.constant 3 : i32
    %68 = arith.index_cast %c3_i32 : i32 to index
    %c0_18 = arith.constant 0 : index
    %c0_19 = arith.constant 0 : index
    %69 = vector.load %arg0[%68, %c0_18, %c0_19] : memref<8x8x128xf32, #tpu.memory_space<vmem>>, vector<1x8x128xf32>
    %70 = vector.shape_cast %69 : vector<1x8x128xf32> to vector<8x128xf32>
    %c0_20 = arith.constant 0 : index
    %c0_21 = arith.constant 0 : index
    %71 = vector.load %arg1[%c0_20, %c0_21] : memref<32x128xf32, #tpu.memory_space<vmem>>, vector<32x128xf32>
    %cst_22 = arith.constant dense<0.000000e+00> : vector<8x128xf32>
    %72 = tpu.matmul %67, %71, %cst_22 {dimension_numbers = #tpu.dot_dimension_numbers<[1], [0], [0], [1], [0, 0, 1, 1], [], []>} : vector<8x32xf32>, vector<32x128xf32>, vector<8x128xf32> -> vector<8x128xf32>
    %73 = arith.addf %70, %72 : vector<8x128xf32>
    %74 = vector.extract_strided_slice %73 {offsets = [0, 0], sizes = [8, 96], strides = [1, 1]} : vector<8x128xf32> to vector<8x96xf32>
    %75 = arith.negf %74 : vector<8x96xf32>
    %76 = math.exp %75 : vector<8x96xf32>
    %cst_23 = arith.constant 1.000000e+00 : f32
    %77 = vector.broadcast %cst_23 : f32 to vector<8x96xf32>
    %78 = arith.addf %77, %76 : vector<8x96xf32>
    %79 = arith.divf %77, %78 : vector<8x96xf32>
    %80 = vector.extract_strided_slice %79 {offsets = [0, 0], sizes = [8, 32], strides = [1, 1]} : vector<8x96xf32> to vector<8x32xf32>
    %81 = vector.extract_strided_slice %79 {offsets = [0, 32], sizes = [8, 32], strides = [1, 1]} : vector<8x96xf32> to vector<8x32xf32>
    %82 = vector.extract_strided_slice %79 {offsets = [0, 64], sizes = [8, 32], strides = [1, 1]} : vector<8x96xf32> to vector<8x32xf32>
    %83 = vector.extract_strided_slice %73 {offsets = [0, 96], sizes = [8, 32], strides = [1, 1]} : vector<8x128xf32> to vector<8x32xf32>
    %84 = math.tanh %83 : vector<8x32xf32>
    %85 = arith.mulf %81, %65 : vector<8x32xf32>
    %86 = arith.mulf %80, %84 : vector<8x32xf32>
    %87 = arith.addf %85, %86 : vector<8x32xf32>
    %88 = math.tanh %87 : vector<8x32xf32>
    %89 = arith.mulf %82, %88 : vector<8x32xf32>
    %c4_i32 = arith.constant 4 : i32
    %90 = arith.index_cast %c4_i32 : i32 to index
    %c0_24 = arith.constant 0 : index
    %c0_25 = arith.constant 0 : index
    %91 = vector.load %arg0[%90, %c0_24, %c0_25] : memref<8x8x128xf32, #tpu.memory_space<vmem>>, vector<1x8x128xf32>
    %92 = vector.shape_cast %91 : vector<1x8x128xf32> to vector<8x128xf32>
    %c0_26 = arith.constant 0 : index
    %c0_27 = arith.constant 0 : index
    %93 = vector.load %arg1[%c0_26, %c0_27] : memref<32x128xf32, #tpu.memory_space<vmem>>, vector<32x128xf32>
    %cst_28 = arith.constant dense<0.000000e+00> : vector<8x128xf32>
    %94 = tpu.matmul %89, %93, %cst_28 {dimension_numbers = #tpu.dot_dimension_numbers<[1], [0], [0], [1], [0, 0, 1, 1], [], []>} : vector<8x32xf32>, vector<32x128xf32>, vector<8x128xf32> -> vector<8x128xf32>
    %95 = arith.addf %92, %94 : vector<8x128xf32>
    %96 = vector.extract_strided_slice %95 {offsets = [0, 0], sizes = [8, 96], strides = [1, 1]} : vector<8x128xf32> to vector<8x96xf32>
    %97 = arith.negf %96 : vector<8x96xf32>
    %98 = math.exp %97 : vector<8x96xf32>
    %cst_29 = arith.constant 1.000000e+00 : f32
    %99 = vector.broadcast %cst_29 : f32 to vector<8x96xf32>
    %100 = arith.addf %99, %98 : vector<8x96xf32>
    %101 = arith.divf %99, %100 : vector<8x96xf32>
    %102 = vector.extract_strided_slice %101 {offsets = [0, 0], sizes = [8, 32], strides = [1, 1]} : vector<8x96xf32> to vector<8x32xf32>
    %103 = vector.extract_strided_slice %101 {offsets = [0, 32], sizes = [8, 32], strides = [1, 1]} : vector<8x96xf32> to vector<8x32xf32>
    %104 = vector.extract_strided_slice %101 {offsets = [0, 64], sizes = [8, 32], strides = [1, 1]} : vector<8x96xf32> to vector<8x32xf32>
    %105 = vector.extract_strided_slice %95 {offsets = [0, 96], sizes = [8, 32], strides = [1, 1]} : vector<8x128xf32> to vector<8x32xf32>
    %106 = math.tanh %105 : vector<8x32xf32>
    %107 = arith.mulf %103, %87 : vector<8x32xf32>
    %108 = arith.mulf %102, %106 : vector<8x32xf32>
    %109 = arith.addf %107, %108 : vector<8x32xf32>
    %110 = math.tanh %109 : vector<8x32xf32>
    %111 = arith.mulf %104, %110 : vector<8x32xf32>
    %c5_i32 = arith.constant 5 : i32
    %112 = arith.index_cast %c5_i32 : i32 to index
    %c0_30 = arith.constant 0 : index
    %c0_31 = arith.constant 0 : index
    %113 = vector.load %arg0[%112, %c0_30, %c0_31] : memref<8x8x128xf32, #tpu.memory_space<vmem>>, vector<1x8x128xf32>
    %114 = vector.shape_cast %113 : vector<1x8x128xf32> to vector<8x128xf32>
    %c0_32 = arith.constant 0 : index
    %c0_33 = arith.constant 0 : index
    %115 = vector.load %arg1[%c0_32, %c0_33] : memref<32x128xf32, #tpu.memory_space<vmem>>, vector<32x128xf32>
    %cst_34 = arith.constant dense<0.000000e+00> : vector<8x128xf32>
    %116 = tpu.matmul %111, %115, %cst_34 {dimension_numbers = #tpu.dot_dimension_numbers<[1], [0], [0], [1], [0, 0, 1, 1], [], []>} : vector<8x32xf32>, vector<32x128xf32>, vector<8x128xf32> -> vector<8x128xf32>
    %117 = arith.addf %114, %116 : vector<8x128xf32>
    %118 = vector.extract_strided_slice %117 {offsets = [0, 0], sizes = [8, 96], strides = [1, 1]} : vector<8x128xf32> to vector<8x96xf32>
    %119 = arith.negf %118 : vector<8x96xf32>
    %120 = math.exp %119 : vector<8x96xf32>
    %cst_35 = arith.constant 1.000000e+00 : f32
    %121 = vector.broadcast %cst_35 : f32 to vector<8x96xf32>
    %122 = arith.addf %121, %120 : vector<8x96xf32>
    %123 = arith.divf %121, %122 : vector<8x96xf32>
    %124 = vector.extract_strided_slice %123 {offsets = [0, 0], sizes = [8, 32], strides = [1, 1]} : vector<8x96xf32> to vector<8x32xf32>
    %125 = vector.extract_strided_slice %123 {offsets = [0, 32], sizes = [8, 32], strides = [1, 1]} : vector<8x96xf32> to vector<8x32xf32>
    %126 = vector.extract_strided_slice %123 {offsets = [0, 64], sizes = [8, 32], strides = [1, 1]} : vector<8x96xf32> to vector<8x32xf32>
    %127 = vector.extract_strided_slice %117 {offsets = [0, 96], sizes = [8, 32], strides = [1, 1]} : vector<8x128xf32> to vector<8x32xf32>
    %128 = math.tanh %127 : vector<8x32xf32>
    %129 = arith.mulf %125, %109 : vector<8x32xf32>
    %130 = arith.mulf %124, %128 : vector<8x32xf32>
    %131 = arith.addf %129, %130 : vector<8x32xf32>
    %132 = math.tanh %131 : vector<8x32xf32>
    %133 = arith.mulf %126, %132 : vector<8x32xf32>
    %c6_i32 = arith.constant 6 : i32
    %134 = arith.index_cast %c6_i32 : i32 to index
    %c0_36 = arith.constant 0 : index
    %c0_37 = arith.constant 0 : index
    %135 = vector.load %arg0[%134, %c0_36, %c0_37] : memref<8x8x128xf32, #tpu.memory_space<vmem>>, vector<1x8x128xf32>
    %136 = vector.shape_cast %135 : vector<1x8x128xf32> to vector<8x128xf32>
    %c0_38 = arith.constant 0 : index
    %c0_39 = arith.constant 0 : index
    %137 = vector.load %arg1[%c0_38, %c0_39] : memref<32x128xf32, #tpu.memory_space<vmem>>, vector<32x128xf32>
    %cst_40 = arith.constant dense<0.000000e+00> : vector<8x128xf32>
    %138 = tpu.matmul %133, %137, %cst_40 {dimension_numbers = #tpu.dot_dimension_numbers<[1], [0], [0], [1], [0, 0, 1, 1], [], []>} : vector<8x32xf32>, vector<32x128xf32>, vector<8x128xf32> -> vector<8x128xf32>
    %139 = arith.addf %136, %138 : vector<8x128xf32>
    %140 = vector.extract_strided_slice %139 {offsets = [0, 0], sizes = [8, 96], strides = [1, 1]} : vector<8x128xf32> to vector<8x96xf32>
    %141 = arith.negf %140 : vector<8x96xf32>
    %142 = math.exp %141 : vector<8x96xf32>
    %cst_41 = arith.constant 1.000000e+00 : f32
    %143 = vector.broadcast %cst_41 : f32 to vector<8x96xf32>
    %144 = arith.addf %143, %142 : vector<8x96xf32>
    %145 = arith.divf %143, %144 : vector<8x96xf32>
    %146 = vector.extract_strided_slice %145 {offsets = [0, 0], sizes = [8, 32], strides = [1, 1]} : vector<8x96xf32> to vector<8x32xf32>
    %147 = vector.extract_strided_slice %145 {offsets = [0, 32], sizes = [8, 32], strides = [1, 1]} : vector<8x96xf32> to vector<8x32xf32>
    %148 = vector.extract_strided_slice %145 {offsets = [0, 64], sizes = [8, 32], strides = [1, 1]} : vector<8x96xf32> to vector<8x32xf32>
    %149 = vector.extract_strided_slice %139 {offsets = [0, 96], sizes = [8, 32], strides = [1, 1]} : vector<8x128xf32> to vector<8x32xf32>
    %150 = math.tanh %149 : vector<8x32xf32>
    %151 = arith.mulf %147, %131 : vector<8x32xf32>
    %152 = arith.mulf %146, %150 : vector<8x32xf32>
    %153 = arith.addf %151, %152 : vector<8x32xf32>
    %154 = math.tanh %153 : vector<8x32xf32>
    %155 = arith.mulf %148, %154 : vector<8x32xf32>
    %c7_i32 = arith.constant 7 : i32
    %156 = arith.index_cast %c7_i32 : i32 to index
    %c0_42 = arith.constant 0 : index
    %c0_43 = arith.constant 0 : index
    %157 = vector.load %arg0[%156, %c0_42, %c0_43] : memref<8x8x128xf32, #tpu.memory_space<vmem>>, vector<1x8x128xf32>
    %158 = vector.shape_cast %157 : vector<1x8x128xf32> to vector<8x128xf32>
    %c0_44 = arith.constant 0 : index
    %c0_45 = arith.constant 0 : index
    %159 = vector.load %arg1[%c0_44, %c0_45] : memref<32x128xf32, #tpu.memory_space<vmem>>, vector<32x128xf32>
    %cst_46 = arith.constant dense<0.000000e+00> : vector<8x128xf32>
    %160 = tpu.matmul %155, %159, %cst_46 {dimension_numbers = #tpu.dot_dimension_numbers<[1], [0], [0], [1], [0, 0, 1, 1], [], []>} : vector<8x32xf32>, vector<32x128xf32>, vector<8x128xf32> -> vector<8x128xf32>
    %161 = arith.addf %158, %160 : vector<8x128xf32>
    %162 = vector.extract_strided_slice %161 {offsets = [0, 0], sizes = [8, 96], strides = [1, 1]} : vector<8x128xf32> to vector<8x96xf32>
    %163 = arith.negf %162 : vector<8x96xf32>
    %164 = math.exp %163 : vector<8x96xf32>
    %cst_47 = arith.constant 1.000000e+00 : f32
    %165 = vector.broadcast %cst_47 : f32 to vector<8x96xf32>
    %166 = arith.addf %165, %164 : vector<8x96xf32>
    %167 = arith.divf %165, %166 : vector<8x96xf32>
    %168 = vector.extract_strided_slice %167 {offsets = [0, 0], sizes = [8, 32], strides = [1, 1]} : vector<8x96xf32> to vector<8x32xf32>
    %169 = vector.extract_strided_slice %167 {offsets = [0, 32], sizes = [8, 32], strides = [1, 1]} : vector<8x96xf32> to vector<8x32xf32>
    %170 = vector.extract_strided_slice %167 {offsets = [0, 64], sizes = [8, 32], strides = [1, 1]} : vector<8x96xf32> to vector<8x32xf32>
    %171 = vector.extract_strided_slice %161 {offsets = [0, 96], sizes = [8, 32], strides = [1, 1]} : vector<8x128xf32> to vector<8x32xf32>
    %172 = math.tanh %171 : vector<8x32xf32>
    %173 = arith.mulf %169, %153 : vector<8x32xf32>
    %174 = arith.mulf %168, %172 : vector<8x32xf32>
    %175 = arith.addf %173, %174 : vector<8x32xf32>
    %176 = math.tanh %175 : vector<8x32xf32>
    %177 = arith.mulf %170, %176 : vector<8x32xf32>
    %c8_i32 = arith.constant 8 : i32
    %c0_48 = arith.constant 0 : index
    %c0_49 = arith.constant 0 : index
    %178 = vector.load %arg3[%c0_48, %c0_49] : memref<32x1xf32, #tpu.memory_space<vmem>>, vector<32x1xf32>
    %cst_50 = arith.constant dense<0.000000e+00> : vector<8x1xf32>
    %179 = tpu.matmul %177, %178, %cst_50 {dimension_numbers = #tpu.dot_dimension_numbers<[1], [0], [0], [1], [0, 0, 1, 1], [], []>} : vector<8x32xf32>, vector<32x1xf32>, vector<8x1xf32> -> vector<8x1xf32>
    %c0_51 = arith.constant 0 : index
    %c0_52 = arith.constant 0 : index
    %180 = vector.load %arg2[%c0_51, %c0_52] : memref<8x3xf32, #tpu.memory_space<vmem>>, vector<8x3xf32>
    %c0_53 = arith.constant 0 : index
    %c0_54 = arith.constant 0 : index
    %181 = vector.load %arg4[%c0_53, %c0_54] : memref<3x1xf32, #tpu.memory_space<vmem>>, vector<3x1xf32>
    %cst_55 = arith.constant dense<0.000000e+00> : vector<8x1xf32>
    %182 = tpu.matmul %180, %181, %cst_55 {dimension_numbers = #tpu.dot_dimension_numbers<[1], [0], [0], [1], [0, 0, 1, 1], [], []>} : vector<8x3xf32>, vector<3x1xf32>, vector<8x1xf32> -> vector<8x1xf32>
    %183 = arith.addf %179, %182 : vector<8x1xf32>
    %c0_56 = arith.constant 0 : index
    %c0_57 = arith.constant 0 : index
    %184 = vector.load %arg5[%c0_56, %c0_57] : memref<1x1xf32, #tpu.memory_space<vmem>>, vector<1x1xf32>
    %185 = vector.broadcast %184 : vector<1x1xf32> to vector<8x1xf32>
    %186 = arith.addf %183, %185 : vector<8x1xf32>
    %187 = arith.negf %186 : vector<8x1xf32>
    %188 = math.exp %187 : vector<8x1xf32>
    %cst_58 = arith.constant 1.000000e+00 : f32
    %189 = vector.broadcast %cst_58 : f32 to vector<8x1xf32>
    %190 = arith.addf %189, %188 : vector<8x1xf32>
    %191 = arith.divf %189, %190 : vector<8x1xf32>
    %c0_59 = arith.constant 0 : index
    %c0_60 = arith.constant 0 : index
    %192 = vector.load %arg6[%c0_59, %c0_60] : memref<8x1xf32, #tpu.memory_space<vmem>>, vector<8x1xf32>
    tpu.vector_store %arg6[%c0_59, %c0_60], %191 {strides = array<i32>} : memref<8x1xf32, #tpu.memory_space<vmem>>, vector<8x1xf32>,
    return
  }
}

</mosaic_0001>

<llo_original>
// kernel: tpu_custom_call.1
$region0: #{tpu_custom_call.1}
  #allocation0 [shape = 'u32[]', space=smem, size = 0x4, offset = 0x4, fixed_abs, tag = 'smem constant byte address 0x4 - core index']
  #allocation1 [shape = 'u32[144,128]{1,0:T(1,128)}', space=vmem, size = 0x12000, scoped, tag = 'internal scratch']
  #allocation2 [shape = 'f32[1,1]{1,0:T(1,128)S(1)}', space=vmem, size = 0x200, scoped, tag = 'scoped memory for tpu_custom_call.1']
  %s0 = inlined_call_operand.hbm [shape: f32[8,8,128], index: 0, kind: input, shape index: {}]
  %s1 = inlined_call_operand.vmem [shape: f32[32,128], index: 1, kind: input, shape index: {}]
  %s2 = inlined_call_operand.vmem [shape: f32[8,3], index: 2, kind: input, shape index: {}]
  %s3 = inlined_call_operand.vmem [shape: f32[32,1], index: 3, kind: input, shape index: {}]
  %s4 = inlined_call_operand.vmem [shape: f32[3,1], index: 4, kind: input, shape index: {}]
  %s5 = inlined_call_operand.<no memory space> [shape: f32[1,1], index: 5, kind: input, shape index: {}]
  %s6 = inlined_call_operand.vmem [shape: f32[8,1], index: 6, kind: output, shape index: {}]
  %s7 = sld [smem:[#allocation0]]
  $region38: #{tpu_custom_call.1} parent=0
    _
  %s9 = ssub.s32 1, %s7
  %s10 = scalar_select 0, %s9, %s7
  %v11 = vstv %s5
  %12 = vst [vmem:[#allocation2] sm:$0x1] %v11
  $region1: #{tpu_custom_call.1} parent=0
    #allocation3 [shape = 'u8[32768]{0}', space=vmem, size = 0x8000, scoped, tag = 'input window, operand 0, single buffered']
    #allocation4 [shape = 's32[1]{0}', space=sflag, size = 0x4, scoped, tag = 'scoped memory for tpu_custom_call.1']
    %13 = vsyncpa [#allocation4], 0
    // Predicated region
    $region2: #{tpu_custom_call.1} parent=1 // pred_check
      _
    $region3: #{tpu_custom_call.1} parent=1 // pred_check_branch
      %15 = sbr.rel (0) target = $region5
    $region4: #{tpu_custom_call.1} parent=1 // pred_region
      %s17 = ssub.s32 1024, 1024
      %18 = vsyncadd [#allocation4], %s17
      %s19 = sshll.u32 [#allocation3], 4
      %s20 = int_to_ptr.vmem [resolvable:$true] %s19
      %25 = dma.hbm_to_vmem [thread:$0]  %s0, 1024, %s20, [#allocation4], 128, 128, 8
    $region5: #{tpu_custom_call.1} parent=1 // pred_fallthru
      _
    // Predicated region
    $region6: #{tpu_custom_call.1} parent=1 // pred_check
      _
    $region7: #{tpu_custom_call.1} parent=1 // pred_check_branch
      %27 = sbr.rel (0) target = $region9
    $region8: #{tpu_custom_call.1} parent=1 // pred_region
      _
    $region9: #{tpu_custom_call.1} parent=1 // pred_fallthru
      _
    // Predicated region
    $region10: #{tpu_custom_call.1} parent=1 // pred_check
      _
    $region11: #{tpu_custom_call.1} parent=1 // pred_check_branch
      %29 = sbr.rel (0) target = $region13
    $region12: #{tpu_custom_call.1} parent=1 // pred_region
      _
    $region13: #{tpu_custom_call.1} parent=1 // pred_fallthru
      _
    // Predicated region
    $region14: #{tpu_custom_call.1} parent=1 // pred_check
      _
    $region15: #{tpu_custom_call.1} parent=1 // pred_check_branch
      %31 = sbr.rel (0) target = $region17
    $region16: #{tpu_custom_call.1} parent=1 // pred_region
      _
    $region17: #{tpu_custom_call.1} parent=1 // pred_fallthru
      _
    // Predicated region
    $region18: #{tpu_custom_call.1} parent=1 // pred_check
      _
    $region19: #{tpu_custom_call.1} parent=1 // pred_check_branch
      %33 = sbr.rel (0) target = $region21
    $region20: #{tpu_custom_call.1} parent=1 // pred_region
      _
    $region21: #{tpu_custom_call.1} parent=1 // pred_fallthru
      _
    // Predicated region
    $region22: #{tpu_custom_call.1} parent=1 // pred_check
      _
    $region23: #{tpu_custom_call.1} parent=1 // pred_check_branch
      %35 = sbr.rel (0) target = $region25
    $region24: #{tpu_custom_call.1} parent=1 // pred_region
      _
    $region25: #{tpu_custom_call.1} parent=1 // pred_fallthru
      _
    // Predicated region
    $region26: #{tpu_custom_call.1} parent=1 // pred_check
      _
    $region27: #{tpu_custom_call.1} parent=1 // pred_check_branch
      %37 = sbr.rel (0) target = $region29
    $region28: #{tpu_custom_call.1} parent=1 // pred_region
      %38 = dma.done [#allocation4], 1024
    $region29: #{tpu_custom_call.1} parent=1 // pred_fallthru
      _
    %v39 = vld [vmem:[#allocation3] sm:$0xff]
    %v40 = vld [vmem:[%s1] sm:$0xff]
    %v41 = vld [vmem:[%s1 + $0x8] sm:$0xff]
    %v42 = vld [vmem:[%s1 + $0x10] sm:$0xff]
    %v43 = vld [vmem:[%s1 + $0x18] sm:$0xff]
    %vm44 = vcmask 261120
    %v46 = vsel %vm44, 0.0, 0
    %48 = vmatprep.subr.mxu0 0.0
    %49 = vmatpush1.msra.mxu0 0.0
    %50 = vmatprep.subr.mxu0 0.0
    %51 = vmatpush1.msra.mxu0 0.0
    %52 = vmatprep.subr.mxu0 0.0
    %53 = vmatpush1.msra.mxu0 0.0
    %54 = vmatprep.subr.mxu0 0.0
    %55 = vmatpush1.msra.mxu0 0.0
    %56 = vmatprep.subr.mxu0 0.0
    %57 = vmatpush1.msra.mxu0 0.0
    %58 = vmatprep.subr.mxu0 0.0
    %59 = vmatpush1.msra.mxu0 0.0
    %60 = vmatprep.subr.mxu0 0.0
    %61 = vmatpush1.msra.mxu0 0.0
    %62 = vmatprep.subr.mxu0 0.0
    %63 = vmatpush1.msra.mxu0 0.0
    %64 = vmatprep.subr.mxu0 0.0
    %65 = vmatpush1.msra.mxu0 0.0
    %66 = vmatprep.subr.mxu0 0.0
    %67 = vmatpush1.msra.mxu0 0.0
    %68 = vmatprep.subr.mxu0 0.0
    %69 = vmatpush1.msra.mxu0 0.0
    %70 = vmatprep.subr.mxu0 0.0
    %71 = vmatpush1.msra.mxu0 0.0
    %72 = vmatprep.subr.mxu0 0.0
    %73 = vmatpush1.msra.mxu0 %v43
    %74 = vmatprep.subr.mxu0 0.0
    %75 = vmatpush1.msra.mxu0 %v42
    %76 = vmatprep.subr.mxu0 0.0
    %77 = vmatpush1.msra.mxu0 %v41
    %78 = vmatprep.subr.mxu0 0.0
    %79 = vmatpush1.msra.mxu0 %v40
    %80 = vmatprep.subr.mxu0 0.0
    %81 = vmatpush2.msra.mxu0 0.0
    %82 = vmatprep.subr.mxu0 0.0
    %83 = vmatpush2.msra.mxu0 0.0
    %84 = vmatprep.subr.mxu0 0.0
    %85 = vmatpush2.msra.mxu0 0.0
    %86 = vmatprep.subr.mxu0 0.0
    %87 = vmatpush2.msra.mxu0 0.0
    %88 = vmatprep.subr.mxu0 0.0
    %89 = vmatpush2.msra.mxu0 0.0
    %90 = vmatprep.subr.mxu0 0.0
    %91 = vmatpush2.msra.mxu0 0.0
    %92 = vmatprep.subr.mxu0 0.0
    %93 = vmatpush2.msra.mxu0 0.0
    %94 = vmatprep.subr.mxu0 0.0
    %95 = vmatpush2.msra.mxu0 0.0
    %96 = vmatprep.subr.mxu0 0.0
    %97 = vmatpush2.msra.mxu0 0.0
    %98 = vmatprep.subr.mxu0 0.0
    %99 = vmatpush2.msra.mxu0 0.0
    %100 = vmatprep.subr.mxu0 0.0
    %101 = vmatpush2.msra.mxu0 0.0
    %102 = vmatprep.subr.mxu0 0.0
    %103 = vmatpush2.msra.mxu0 0.0
    %104 = vmatprep.subr.mxu0 0.0
    %105 = vmatpush2.msra.mxu0 0.0
    %106 = vmatprep.subr.mxu0 0.0
    %107 = vmatpush2.msra.mxu0 0.0
    %108 = vmatprep.subr.mxu0 0.0
    %109 = vmatpush2.msra.mxu0 0.0
    %110 = vmatprep.subr.mxu0 0.0
    %111 = vmatpush2.msra.mxu0 0.0
    %112 = vmatprep.mubr.f32.mxu0 0.0
    %113 = vmatmul.mubr.f32.gmra.mxu0 %v46
    %v114 = vpop.f32.mrf.mxu0
    %v115 = vadd.f32 0.0, %v114
    %v116 = vpop.f32.mrf.mxu0
    %117 = vdwg.mxu0
    %v118 = vadd.f32 %v39, %v115
    %v119 = vxor.u32 %v118, 2147483648
    %v120 = vmul.f32 %v119, 1.442695
    %v121 = vpow.pop %v120
    %v122 = vadd.f32 %v121, 1.0
    %v123 = vrcp.pop %v122
    %v124 = vmul.f32 1.0, %v123
    %v125 = vtanh.pop %v118
    %v126 = vmul.f32 %v124, 0.0
    %128 = vrot.lane.b32.xlu0 %v125, 32
    %v129 = vpop.permute.xlu0 %128
    %v131 = vmul.f32 %v124, %v129
    %133 = vrot.lane.b32.xlu0 %v131, 32
    %v134 = vpop.permute.xlu0 %133
    %v136 = vadd.f32 %v126, %v134
    %v137 = vtanh.pop %v136
    %139 = vrot.lane.b32.xlu0 %v137, 32
    %v140 = vpop.permute.xlu0 %139
    %v142 = vmul.f32 %v124, %v140
    %s143 = scalar_lea.vmem [#allocation3], 8
    %v144 = vld [vmem:[%s143] sm:$0xff]
    %146 = vrot.lane.b32.xlu0 %v142, 64
    %v147 = vpop.permute.xlu0 %146
    %v148 = vsel %vm44, %v147, 0
    %150 = vmatprep.subr.mxu0 0.0
    %151 = vmatpush1.msra.mxu0 0.0
    %152 = vmatprep.subr.mxu0 0.0
    %153 = vmatpush1.msra.mxu0 0.0
    %154 = vmatprep.subr.mxu0 0.0
    %155 = vmatpush1.msra.mxu0 0.0
    %156 = vmatprep.subr.mxu0 0.0
    %157 = vmatpush1.msra.mxu0 0.0
    %158 = vmatprep.subr.mxu0 0.0
    %159 = vmatpush1.msra.mxu0 0.0
    %160 = vmatprep.subr.mxu0 0.0
    %161 = vmatpush1.msra.mxu0 0.0
    %162 = vmatprep.subr.mxu0 0.0
    %163 = vmatpush1.msra.mxu0 0.0
    %164 = vmatprep.subr.mxu0 0.0
    %165 = vmatpush1.msra.mxu0 0.0
    %166 = vmatprep.subr.mxu0 0.0
    %167 = vmatpush1.msra.mxu0 0.0
    %168 = vmatprep.subr.mxu0 0.0
    %169 = vmatpush1.msra.mxu0 0.0
    %170 = vmatprep.subr.mxu0 0.0
    %171 = vmatpush1.msra.mxu0 0.0
    %172 = vmatprep.subr.mxu0 0.0
    %173 = vmatpush1.msra.mxu0 0.0
    %174 = vmatprep.subr.mxu0 0.0
    %175 = vmatpush1.msra.mxu0 %v43
    %176 = vmatprep.subr.mxu0 0.0
    %177 = vmatpush1.msra.mxu0 %v42
    %178 = vmatprep.subr.mxu0 0.0
    %179 = vmatpush1.msra.mxu0 %v41
    %180 = vmatprep.subr.mxu0 0.0
    %181 = vmatpush1.msra.mxu0 %v40
    %182 = vmatprep.subr.mxu0 0.0
    %183 = vmatpush2.msra.mxu0 0.0
    %184 = vmatprep.subr.mxu0 0.0
    %185 = vmatpush2.msra.mxu0 0.0
    %186 = vmatprep.subr.mxu0 0.0
    %187 = vmatpush2.msra.mxu0 0.0
    %188 = vmatprep.subr.mxu0 0.0
    %189 = vmatpush2.msra.mxu0 0.0
    %190 = vmatprep.subr.mxu0 0.0
    %191 = vmatpush2.msra.mxu0 0.0
    %192 = vmatprep.subr.mxu0 0.0
    %193 = vmatpush2.msra.mxu0 0.0
    %194 = vmatprep.subr.mxu0 0.0
    %195 = vmatpush2.msra.mxu0 0.0
    %196 = vmatprep.subr.mxu0 0.0
    %197 = vmatpush2.msra.mxu0 0.0
    %198 = vmatprep.subr.mxu0 0.0
    %199 = vmatpush2.msra.mxu0 0.0
    %200 = vmatprep.subr.mxu0 0.0
    %201 = vmatpush2.msra.mxu0 0.0
    %202 = vmatprep.subr.mxu0 0.0
    %203 = vmatpush2.msra.mxu0 0.0
    %204 = vmatprep.subr.mxu0 0.0
    %205 = vmatpush2.msra.mxu0 0.0
    %206 = vmatprep.subr.mxu0 0.0
    %207 = vmatpush2.msra.mxu0 0.0
    %208 = vmatprep.subr.mxu0 0.0
    %209 = vmatpush2.msra.mxu0 0.0
    %210 = vmatprep.subr.mxu0 0.0
    %211 = vmatpush2.msra.mxu0 0.0
    %212 = vmatprep.subr.mxu0 0.0
    %213 = vmatpush2.msra.mxu0 0.0
    %214 = vmatprep.mubr.f32.mxu0 0.0
    %215 = vmatmul.mubr.f32.gmra.mxu0 %v148
    %v216 = vpop.f32.mrf.mxu0
    %v217 = vadd.f32 0.0, %v216
    %v218 = vpop.f32.mrf.mxu0
    %219 = vdwg.mxu0
    %v220 = vadd.f32 %v144, %v217
    %v221 = vxor.u32 %v220, 2147483648
    %v222 = vmul.f32 %v221, 1.442695
    %v223 = vpow.pop %v222
    %v224 = vadd.f32 %v223, 1.0
    %v225 = vrcp.pop %v224
    %v226 = vmul.f32 1.0, %v225
    %v227 = vtanh.pop %v220
    %v228 = vmul.f32 %v226, %v136
    %230 = vrot.lane.b32.xlu0 %v227, 32
    %v231 = vpop.permute.xlu0 %230
    %v233 = vmul.f32 %v226, %v231
    %235 = vrot.lane.b32.xlu0 %v233, 32
    %v236 = vpop.permute.xlu0 %235
    %v238 = vadd.f32 %v228, %v236
    %v239 = vtanh.pop %v238
    %241 = vrot.lane.b32.xlu0 %v239, 32
    %v242 = vpop.permute.xlu0 %241
    %v244 = vmul.f32 %v226, %v242
    %s245 = scalar_lea.vmem [#allocation3], 16
    %v246 = vld [vmem:[%s245] sm:$0xff]
    %248 = vrot.lane.b32.xlu0 %v244, 64
    %v249 = vpop.permute.xlu0 %248
    %v250 = vsel %vm44, %v249, 0
    %252 = vmatprep.subr.mxu0 0.0
    %253 = vmatpush1.msra.mxu0 0.0
    %254 = vmatprep.subr.mxu0 0.0
    %255 = vmatpush1.msra.mxu0 0.0
    %256 = vmatprep.subr.mxu0 0.0
    %257 = vmatpush1.msra.mxu0 0.0
    %258 = vmatprep.subr.mxu0 0.0
    %259 = vmatpush1.msra.mxu0 0.0
    %260 = vmatprep.subr.mxu0 0.0
    %261 = vmatpush1.msra.mxu0 0.0
    %262 = vmatprep.subr.mxu0 0.0
    %263 = vmatpush1.msra.mxu0 0.0
    %264 = vmatprep.subr.mxu0 0.0
    %265 = vmatpush1.msra.mxu0 0.0
    %266 = vmatprep.subr.mxu0 0.0
    %267 = vmatpush1.msra.mxu0 0.0
    %268 = vmatprep.subr.mxu0 0.0
    %269 = vmatpush1.msra.mxu0 0.0
    %270 = vmatprep.subr.mxu0 0.0
    %271 = vmatpush1.msra.mxu0 0.0
    %272 = vmatprep.subr.mxu0 0.0
    %273 = vmatpush1.msra.mxu0 0.0
    %274 = vmatprep.subr.mxu0 0.0
    %275 = vmatpush1.msra.mxu0 0.0
    %276 = vmatprep.subr.mxu0 0.0
    %277 = vmatpush1.msra.mxu0 %v43
    %278 = vmatprep.subr.mxu0 0.0
    %279 = vmatpush1.msra.mxu0 %v42
    %280 = vmatprep.subr.mxu0 0.0
    %281 = vmatpush1.msra.mxu0 %v41
    %282 = vmatprep.subr.mxu0 0.0
    %283 = vmatpush1.msra.mxu0 %v40
    %284 = vmatprep.subr.mxu0 0.0
    %285 = vmatpush2.msra.mxu0 0.0
    %286 = vmatprep.subr.mxu0 0.0
    %287 = vmatpush2.msra.mxu0 0.0
    %288 = vmatprep.subr.mxu0 0.0
    %289 = vmatpush2.msra.mxu0 0.0
    %290 = vmatprep.subr.mxu0 0.0
    %291 = vmatpush2.msra.mxu0 0.0
    %292 = vmatprep.subr.mxu0 0.0
    %293 = vmatpush2.msra.mxu0 0.0
    %294 = vmatprep.subr.mxu0 0.0
    %295 = vmatpush2.msra.mxu0 0.0
    %296 = vmatprep.subr.mxu0 0.0
    %297 = vmatpush2.msra.mxu0 0.0
    %298 = vmatprep.subr.mxu0 0.0
    %299 = vmatpush2.msra.mxu0 0.0
    %300 = vmatprep.subr.mxu0 0.0
    %301 = vmatpush2.msra.mxu0 0.0
    %302 = vmatprep.subr.mxu0 0.0
    %303 = vmatpush2.msra.mxu0 0.0
    %304 = vmatprep.subr.mxu0 0.0
    %305 = vmatpush2.msra.mxu0 0.0
    %306 = vmatprep.subr.mxu0 0.0
    %307 = vmatpush2.msra.mxu0 0.0
    %308 = vmatprep.subr.mxu0 0.0
    %309 = vmatpush2.msra.mxu0 0.0
    %310 = vmatprep.subr.mxu0 0.0
    %311 = vmatpush2.msra.mxu0 0.0
    %312 = vmatprep.subr.mxu0 0.0
    %313 = vmatpush2.msra.mxu0 0.0
    %314 = vmatprep.subr.mxu0 0.0
    %315 = vmatpush2.msra.mxu0 0.0
    %316 = vmatprep.mubr.f32.mxu0 0.0
    %317 = vmatmul.mubr.f32.gmra.mxu0 %v250
    %v318 = vpop.f32.mrf.mxu0
    %v319 = vadd.f32 0.0, %v318
    %v320 = vpop.f32.mrf.mxu0
    %321 = vdwg.mxu0
    %v322 = vadd.f32 %v246, %v319
    %v323 = vxor.u32 %v322, 2147483648
    %v324 = vmul.f32 %v323, 1.442695
    %v325 = vpow.pop %v324
    %v326 = vadd.f32 %v325, 1.0
    %v327 = vrcp.pop %v326
    %v328 = vmul.f32 1.0, %v327
    %v329 = vtanh.pop %v322
    %v330 = vmul.f32 %v328, %v238
    %332 = vrot.lane.b32.xlu0 %v329, 32
    %v333 = vpop.permute.xlu0 %332
    %v335 = vmul.f32 %v328, %v333
    %337 = vrot.lane.b32.xlu0 %v335, 32
    %v338 = vpop.permute.xlu0 %337
    %v340 = vadd.f32 %v330, %v338
    %v341 = vtanh.pop %v340
    %343 = vrot.lane.b32.xlu0 %v341, 32
    %v344 = vpop.permute.xlu0 %343
    %v346 = vmul.f32 %v328, %v344
    %s347 = scalar_lea.vmem [#allocation3], 24
    %v348 = vld [vmem:[%s347] sm:$0xff]
    %350 = vrot.lane.b32.xlu0 %v346, 64
    %v351 = vpop.permute.xlu0 %350
    %v352 = vsel %vm44, %v351, 0
    %354 = vmatprep.subr.mxu0 0.0
    %355 = vmatpush1.msra.mxu0 0.0
    %356 = vmatprep.subr.mxu0 0.0
    %357 = vmatpush1.msra.mxu0 0.0
    %358 = vmatprep.subr.mxu0 0.0
    %359 = vmatpush1.msra.mxu0 0.0
    %360 = vmatprep.subr.mxu0 0.0
    %361 = vmatpush1.msra.mxu0 0.0
    %362 = vmatprep.subr.mxu0 0.0
    %363 = vmatpush1.msra.mxu0 0.0
    %364 = vmatprep.subr.mxu0 0.0
    %365 = vmatpush1.msra.mxu0 0.0
    %366 = vmatprep.subr.mxu0 0.0
    %367 = vmatpush1.msra.mxu0 0.0
    %368 = vmatprep.subr.mxu0 0.0
    %369 = vmatpush1.msra.mxu0 0.0
    %370 = vmatprep.subr.mxu0 0.0
    %371 = vmatpush1.msra.mxu0 0.0
    %372 = vmatprep.subr.mxu0 0.0
    %373 = vmatpush1.msra.mxu0 0.0
    %374 = vmatprep.subr.mxu0 0.0
    %375 = vmatpush1.msra.mxu0 0.0
    %376 = vmatprep.subr.mxu0 0.0
    %377 = vmatpush1.msra.mxu0 0.0
    %378 = vmatprep.subr.mxu0 0.0
    %379 = vmatpush1.msra.mxu0 %v43
    %380 = vmatprep.subr.mxu0 0.0
    %381 = vmatpush1.msra.mxu0 %v42
    %382 = vmatprep.subr.mxu0 0.0
    %383 = vmatpush1.msra.mxu0 %v41
    %384 = vmatprep.subr.mxu0 0.0
    %385 = vmatpush1.msra.mxu0 %v40
    %386 = vmatprep.subr.mxu0 0.0
    %387 = vmatpush2.msra.mxu0 0.0
    %388 = vmatprep.subr.mxu0 0.0
    %389 = vmatpush2.msra.mxu0 0.0
    %390 = vmatprep.subr.mxu0 0.0
    %391 = vmatpush2.msra.mxu0 0.0
    %392 = vmatprep.subr.mxu0 0.0
    %393 = vmatpush2.msra.mxu0 0.0
    %394 = vmatprep.subr.mxu0 0.0
    %395 = vmatpush2.msra.mxu0 0.0
    %396 = vmatprep.subr.mxu0 0.0
    %397 = vmatpush2.msra.mxu0 0.0
    %398 = vmatprep.subr.mxu0 0.0
    %399 = vmatpush2.msra.mxu0 0.0
    %400 = vmatprep.subr.mxu0 0.0
    %401 = vmatpush2.msra.mxu0 0.0
    %402 = vmatprep.subr.mxu0 0.0
    %403 = vmatpush2.msra.mxu0 0.0
    %404 = vmatprep.subr.mxu0 0.0
    %405 = vmatpush2.msra.mxu0 0.0
    %406 = vmatprep.subr.mxu0 0.0
    %407 = vmatpush2.msra.mxu0 0.0
    %408 = vmatprep.subr.mxu0 0.0
    %409 = vmatpush2.msra.mxu0 0.0
    %410 = vmatprep.subr.mxu0 0.0
    %411 = vmatpush2.msra.mxu0 0.0
    %412 = vmatprep.subr.mxu0 0.0
    %413 = vmatpush2.msra.mxu0 0.0
    %414 = vmatprep.subr.mxu0 0.0
    %415 = vmatpush2.msra.mxu0 0.0
    %416 = vmatprep.subr.mxu0 0.0
    %417 = vmatpush2.msra.mxu0 0.0
    %418 = vmatprep.mubr.f32.mxu0 0.0
    %419 = vmatmul.mubr.f32.gmra.mxu0 %v352
    %v420 = vpop.f32.mrf.mxu0
    %v421 = vadd.f32 0.0, %v420
    %v422 = vpop.f32.mrf.mxu0
    %423 = vdwg.mxu0
    %v424 = vadd.f32 %v348, %v421
    %v425 = vxor.u32 %v424, 2147483648
    %v426 = vmul.f32 %v425, 1.442695
    %v427 = vpow.pop %v426
    %v428 = vadd.f32 %v427, 1.0
    %v429 = vrcp.pop %v428
    %v430 = vmul.f32 1.0, %v429
    %v431 = vtanh.pop %v424
    %v432 = vmul.f32 %v430, %v340
    %434 = vrot.lane.b32.xlu0 %v431, 32
    %v435 = vpop.permute.xlu0 %434
    %v437 = vmul.f32 %v430, %v435
    %439 = vrot.lane.b32.xlu0 %v437, 32
    %v440 = vpop.permute.xlu0 %439
    %v442 = vadd.f32 %v432, %v440
    %v443 = vtanh.pop %v442
    %445 = vrot.lane.b32.xlu0 %v443, 32
    %v446 = vpop.permute.xlu0 %445
    %v448 = vmul.f32 %v430, %v446
    %s449 = scalar_lea.vmem [#allocation3], 32
    %v450 = vld [vmem:[%s449] sm:$0xff]
    %452 = vrot.lane.b32.xlu0 %v448, 64
    %v453 = vpop.permute.xlu0 %452
    %v454 = vsel %vm44, %v453, 0
    %456 = vmatprep.subr.mxu0 0.0
    %457 = vmatpush1.msra.mxu0 0.0
    %458 = vmatprep.subr.mxu0 0.0
    %459 = vmatpush1.msra.mxu0 0.0
    %460 = vmatprep.subr.mxu0 0.0
    %461 = vmatpush1.msra.mxu0 0.0
    %462 = vmatprep.subr.mxu0 0.0
    %463 = vmatpush1.msra.mxu0 0.0
    %464 = vmatprep.subr.mxu0 0.0
    %465 = vmatpush1.msra.mxu0 0.0
    %466 = vmatprep.subr.mxu0 0.0
    %467 = vmatpush1.msra.mxu0 0.0
    %468 = vmatprep.subr.mxu0 0.0
    %469 = vmatpush1.msra.mxu0 0.0
    %470 = vmatprep.subr.mxu0 0.0
    %471 = vmatpush1.msra.mxu0 0.0
    %472 = vmatprep.subr.mxu0 0.0
    %473 = vmatpush1.msra.mxu0 0.0
    %474 = vmatprep.subr.mxu0 0.0
    %475 = vmatpush1.msra.mxu0 0.0
    %476 = vmatprep.subr.mxu0 0.0
    %477 = vmatpush1.msra.mxu0 0.0
    %478 = vmatprep.subr.mxu0 0.0
    %479 = vmatpush1.msra.mxu0 0.0
    %480 = vmatprep.subr.mxu0 0.0
    %481 = vmatpush1.msra.mxu0 %v43
    %482 = vmatprep.subr.mxu0 0.0
    %483 = vmatpush1.msra.mxu0 %v42
    %484 = vmatprep.subr.mxu0 0.0
    %485 = vmatpush1.msra.mxu0 %v41
    %486 = vmatprep.subr.mxu0 0.0
    %487 = vmatpush1.msra.mxu0 %v40
    %488 = vmatprep.subr.mxu0 0.0
    %489 = vmatpush2.msra.mxu0 0.0
    %490 = vmatprep.subr.mxu0 0.0
    %491 = vmatpush2.msra.mxu0 0.0
    %492 = vmatprep.subr.mxu0 0.0
    %493 = vmatpush2.msra.mxu0 0.0
    %494 = vmatprep.subr.mxu0 0.0
    %495 = vmatpush2.msra.mxu0 0.0
    %496 = vmatprep.subr.mxu0 0.0
    %497 = vmatpush2.msra.mxu0 0.0
    %498 = vmatprep.subr.mxu0 0.0
    %499 = vmatpush2.msra.mxu0 0.0
    %500 = vmatprep.subr.mxu0 0.0
    %501 = vmatpush2.msra.mxu0 0.0
    %502 = vmatprep.subr.mxu0 0.0
    %503 = vmatpush2.msra.mxu0 0.0
    %504 = vmatprep.subr.mxu0 0.0
    %505 = vmatpush2.msra.mxu0 0.0
    %506 = vmatprep.subr.mxu0 0.0
    %507 = vmatpush2.msra.mxu0 0.0
    %508 = vmatprep.subr.mxu0 0.0
    %509 = vmatpush2.msra.mxu0 0.0
    %510 = vmatprep.subr.mxu0 0.0
    %511 = vmatpush2.msra.mxu0 0.0
    %512 = vmatprep.subr.mxu0 0.0
    %513 = vmatpush2.msra.mxu0 0.0
    %514 = vmatprep.subr.mxu0 0.0
    %515 = vmatpush2.msra.mxu0 0.0
    %516 = vmatprep.subr.mxu0 0.0
    %517 = vmatpush2.msra.mxu0 0.0
    %518 = vmatprep.subr.mxu0 0.0
    %519 = vmatpush2.msra.mxu0 0.0
    %520 = vmatprep.mubr.f32.mxu0 0.0
    %521 = vmatmul.mubr.f32.gmra.mxu0 %v454
    %v522 = vpop.f32.mrf.mxu0
    %v523 = vadd.f32 0.0, %v522
    %v524 = vpop.f32.mrf.mxu0
    %525 = vdwg.mxu0
    %v526 = vadd.f32 %v450, %v523
    %v527 = vxor.u32 %v526, 2147483648
    %v528 = vmul.f32 %v527, 1.442695
    %v529 = vpow.pop %v528
    %v530 = vadd.f32 %v529, 1.0
    %v531 = vrcp.pop %v530
    %v532 = vmul.f32 1.0, %v531
    %v533 = vtanh.pop %v526
    %v534 = vmul.f32 %v532, %v442
    %536 = vrot.lane.b32.xlu0 %v533, 32
    %v537 = vpop.permute.xlu0 %536
    %v539 = vmul.f32 %v532, %v537
    %541 = vrot.lane.b32.xlu0 %v539, 32
    %v542 = vpop.permute.xlu0 %541
    %v544 = vadd.f32 %v534, %v542
    %v545 = vtanh.pop %v544
    %547 = vrot.lane.b32.xlu0 %v545, 32
    %v548 = vpop.permute.xlu0 %547
    %v550 = vmul.f32 %v532, %v548
    %s551 = scalar_lea.vmem [#allocation3], 40
    %v552 = vld [vmem:[%s551] sm:$0xff]
    %554 = vrot.lane.b32.xlu0 %v550, 64
    %v555 = vpop.permute.xlu0 %554
    %v556 = vsel %vm44, %v555, 0
    %558 = vmatprep.subr.mxu0 0.0
    %559 = vmatpush1.msra.mxu0 0.0
    %560 = vmatprep.subr.mxu0 0.0
    %561 = vmatpush1.msra.mxu0 0.0
    %562 = vmatprep.subr.mxu0 0.0
    %563 = vmatpush1.msra.mxu0 0.0
    %564 = vmatprep.subr.mxu0 0.0
    %565 = vmatpush1.msra.mxu0 0.0
    %566 = vmatprep.subr.mxu0 0.0
    %567 = vmatpush1.msra.mxu0 0.0
    %568 = vmatprep.subr.mxu0 0.0
    %569 = vmatpush1.msra.mxu0 0.0
    %570 = vmatprep.subr.mxu0 0.0
    %571 = vmatpush1.msra.mxu0 0.0
    %572 = vmatprep.subr.mxu0 0.0
    %573 = vmatpush1.msra.mxu0 0.0
    %574 = vmatprep.subr.mxu0 0.0
    %575 = vmatpush1.msra.mxu0 0.0
    %576 = vmatprep.subr.mxu0 0.0
    %577 = vmatpush1.msra.mxu0 0.0
    %578 = vmatprep.subr.mxu0 0.0
    %579 = vmatpush1.msra.mxu0 0.0
    %580 = vmatprep.subr.mxu0 0.0
    %581 = vmatpush1.msra.mxu0 0.0
    %582 = vmatprep.subr.mxu0 0.0
    %583 = vmatpush1.msra.mxu0 %v43
    %584 = vmatprep.subr.mxu0 0.0
    %585 = vmatpush1.msra.mxu0 %v42
    %586 = vmatprep.subr.mxu0 0.0
    %587 = vmatpush1.msra.mxu0 %v41
    %588 = vmatprep.subr.mxu0 0.0
    %589 = vmatpush1.msra.mxu0 %v40
    %590 = vmatprep.subr.mxu0 0.0
    %591 = vmatpush2.msra.mxu0 0.0
    %592 = vmatprep.subr.mxu0 0.0
    %593 = vmatpush2.msra.mxu0 0.0
    %594 = vmatprep.subr.mxu0 0.0
    %595 = vmatpush2.msra.mxu0 0.0
    %596 = vmatprep.subr.mxu0 0.0
    %597 = vmatpush2.msra.mxu0 0.0
    %598 = vmatprep.subr.mxu0 0.0
    %599 = vmatpush2.msra.mxu0 0.0
    %600 = vmatprep.subr.mxu0 0.0
    %601 = vmatpush2.msra.mxu0 0.0
    %602 = vmatprep.subr.mxu0 0.0
    %603 = vmatpush2.msra.mxu0 0.0
    %604 = vmatprep.subr.mxu0 0.0
    %605 = vmatpush2.msra.mxu0 0.0
    %606 = vmatprep.subr.mxu0 0.0
    %607 = vmatpush2.msra.mxu0 0.0
    %608 = vmatprep.subr.mxu0 0.0
    %609 = vmatpush2.msra.mxu0 0.0
    %610 = vmatprep.subr.mxu0 0.0
    %611 = vmatpush2.msra.mxu0 0.0
    %612 = vmatprep.subr.mxu0 0.0
    %613 = vmatpush2.msra.mxu0 0.0
    %614 = vmatprep.subr.mxu0 0.0
    %615 = vmatpush2.msra.mxu0 0.0
    %616 = vmatprep.subr.mxu0 0.0
    %617 = vmatpush2.msra.mxu0 0.0
    %618 = vmatprep.subr.mxu0 0.0
    %619 = vmatpush2.msra.mxu0 0.0
    %620 = vmatprep.subr.mxu0 0.0
    %621 = vmatpush2.msra.mxu0 0.0
    %622 = vmatprep.mubr.f32.mxu0 0.0
    %623 = vmatmul.mubr.f32.gmra.mxu0 %v556
    %v624 = vpop.f32.mrf.mxu0
    %v625 = vadd.f32 0.0, %v624
    %v626 = vpop.f32.mrf.mxu0
    %627 = vdwg.mxu0
    %v628 = vadd.f32 %v552, %v625
    %v629 = vxor.u32 %v628, 2147483648
    %v630 = vmul.f32 %v629, 1.442695
    %v631 = vpow.pop %v630
    %v632 = vadd.f32 %v631, 1.0
    %v633 = vrcp.pop %v632
    %v634 = vmul.f32 1.0, %v633
    %v635 = vtanh.pop %v628
    %v636 = vmul.f32 %v634, %v544
    %638 = vrot.lane.b32.xlu0 %v635, 32
    %v639 = vpop.permute.xlu0 %638
    %v641 = vmul.f32 %v634, %v639
    %643 = vrot.lane.b32.xlu0 %v641, 32
    %v644 = vpop.permute.xlu0 %643
    %v646 = vadd.f32 %v636, %v644
    %v647 = vtanh.pop %v646
    %649 = vrot.lane.b32.xlu0 %v647, 32
    %v650 = vpop.permute.xlu0 %649
    %v652 = vmul.f32 %v634, %v650
    %s653 = scalar_lea.vmem [#allocation3], 48
    %v654 = vld [vmem:[%s653] sm:$0xff]
    %656 = vrot.lane.b32.xlu0 %v652, 64
    %v657 = vpop.permute.xlu0 %656
    %v658 = vsel %vm44, %v657, 0
    %660 = vmatprep.subr.mxu0 0.0
    %661 = vmatpush1.msra.mxu0 0.0
    %662 = vmatprep.subr.mxu0 0.0
    %663 = vmatpush1.msra.mxu0 0.0
    %664 = vmatprep.subr.mxu0 0.0
    %665 = vmatpush1.msra.mxu0 0.0
    %666 = vmatprep.subr.mxu0 0.0
    %667 = vmatpush1.msra.mxu0 0.0
    %668 = vmatprep.subr.mxu0 0.0
    %669 = vmatpush1.msra.mxu0 0.0
    %670 = vmatprep.subr.mxu0 0.0
    %671 = vmatpush1.msra.mxu0 0.0
    %672 = vmatprep.subr.mxu0 0.0
    %673 = vmatpush1.msra.mxu0 0.0
    %674 = vmatprep.subr.mxu0 0.0
    %675 = vmatpush1.msra.mxu0 0.0
    %676 = vmatprep.subr.mxu0 0.0
    %677 = vmatpush1.msra.mxu0 0.0
    %678 = vmatprep.subr.mxu0 0.0
    %679 = vmatpush1.msra.mxu0 0.0
    %680 = vmatprep.subr.mxu0 0.0
    %681 = vmatpush1.msra.mxu0 0.0
    %682 = vmatprep.subr.mxu0 0.0
    %683 = vmatpush1.msra.mxu0 0.0
    %684 = vmatprep.subr.mxu0 0.0
    %685 = vmatpush1.msra.mxu0 %v43
    %686 = vmatprep.subr.mxu0 0.0
    %687 = vmatpush1.msra.mxu0 %v42
    %688 = vmatprep.subr.mxu0 0.0
    %689 = vmatpush1.msra.mxu0 %v41
    %690 = vmatprep.subr.mxu0 0.0
    %691 = vmatpush1.msra.mxu0 %v40
    %692 = vmatprep.subr.mxu0 0.0
    %693 = vmatpush2.msra.mxu0 0.0
    %694 = vmatprep.subr.mxu0 0.0
    %695 = vmatpush2.msra.mxu0 0.0
    %696 = vmatprep.subr.mxu0 0.0
    %697 = vmatpush2.msra.mxu0 0.0
    %698 = vmatprep.subr.mxu0 0.0
    %699 = vmatpush2.msra.mxu0 0.0
    %700 = vmatprep.subr.mxu0 0.0
    %701 = vmatpush2.msra.mxu0 0.0
    %702 = vmatprep.subr.mxu0 0.0
    %703 = vmatpush2.msra.mxu0 0.0
    %704 = vmatprep.subr.mxu0 0.0
    %705 = vmatpush2.msra.mxu0 0.0
    %706 = vmatprep.subr.mxu0 0.0
    %707 = vmatpush2.msra.mxu0 0.0
    %708 = vmatprep.subr.mxu0 0.0
    %709 = vmatpush2.msra.mxu0 0.0
    %710 = vmatprep.subr.mxu0 0.0
    %711 = vmatpush2.msra.mxu0 0.0
    %712 = vmatprep.subr.mxu0 0.0
    %713 = vmatpush2.msra.mxu0 0.0
    %714 = vmatprep.subr.mxu0 0.0
    %715 = vmatpush2.msra.mxu0 0.0
    %716 = vmatprep.subr.mxu0 0.0
    %717 = vmatpush2.msra.mxu0 0.0
    %718 = vmatprep.subr.mxu0 0.0
    %719 = vmatpush2.msra.mxu0 0.0
    %720 = vmatprep.subr.mxu0 0.0
    %721 = vmatpush2.msra.mxu0 0.0
    %722 = vmatprep.subr.mxu0 0.0
    %723 = vmatpush2.msra.mxu0 0.0
    %724 = vmatprep.mubr.f32.mxu0 0.0
    %725 = vmatmul.mubr.f32.gmra.mxu0 %v658
    %v726 = vpop.f32.mrf.mxu0
    %v727 = vadd.f32 0.0, %v726
    %v728 = vpop.f32.mrf.mxu0
    %729 = vdwg.mxu0
    %v730 = vadd.f32 %v654, %v727
    %v731 = vxor.u32 %v730, 2147483648
    %v732 = vmul.f32 %v731, 1.442695
    %v733 = vpow.pop %v732
    %v734 = vadd.f32 %v733, 1.0
    %v735 = vrcp.pop %v734
    %v736 = vmul.f32 1.0, %v735
    %v737 = vtanh.pop %v730
    %v738 = vmul.f32 %v736, %v646
    %740 = vrot.lane.b32.xlu0 %v737, 32
    %v741 = vpop.permute.xlu0 %740
    %v743 = vmul.f32 %v736, %v741
    %745 = vrot.lane.b32.xlu0 %v743, 32
    %v746 = vpop.permute.xlu0 %745
    %v748 = vadd.f32 %v738, %v746
    %v749 = vtanh.pop %v748
    %751 = vrot.lane.b32.xlu0 %v749, 32
    %v752 = vpop.permute.xlu0 %751
    %v754 = vmul.f32 %v736, %v752
    %s755 = scalar_lea.vmem [#allocation3], 56
    %v756 = vld [vmem:[%s755] sm:$0xff]
    %758 = vrot.lane.b32.xlu0 %v754, 64
    %v759 = vpop.permute.xlu0 %758
    %v760 = vsel %vm44, %v759, 0
    %762 = vmatprep.subr.mxu0 0.0
    %763 = vmatpush1.msra.mxu0 0.0
    %764 = vmatprep.subr.mxu0 0.0
    %765 = vmatpush1.msra.mxu0 0.0
    %766 = vmatprep.subr.mxu0 0.0
    %767 = vmatpush1.msra.mxu0 0.0
    %768 = vmatprep.subr.mxu0 0.0
    %769 = vmatpush1.msra.mxu0 0.0
    %770 = vmatprep.subr.mxu0 0.0
    %771 = vmatpush1.msra.mxu0 0.0
    %772 = vmatprep.subr.mxu0 0.0
    %773 = vmatpush1.msra.mxu0 0.0
    %774 = vmatprep.subr.mxu0 0.0
    %775 = vmatpush1.msra.mxu0 0.0
    %776 = vmatprep.subr.mxu0 0.0
    %777 = vmatpush1.msra.mxu0 0.0
    %778 = vmatprep.subr.mxu0 0.0
    %779 = vmatpush1.msra.mxu0 0.0
    %780 = vmatprep.subr.mxu0 0.0
    %781 = vmatpush1.msra.mxu0 0.0
    %782 = vmatprep.subr.mxu0 0.0
    %783 = vmatpush1.msra.mxu0 0.0
    %784 = vmatprep.subr.mxu0 0.0
    %785 = vmatpush1.msra.mxu0 0.0
    %786 = vmatprep.subr.mxu0 0.0
    %787 = vmatpush1.msra.mxu0 %v43
    %788 = vmatprep.subr.mxu0 0.0
    %789 = vmatpush1.msra.mxu0 %v42
    %790 = vmatprep.subr.mxu0 0.0
    %791 = vmatpush1.msra.mxu0 %v41
    %792 = vmatprep.subr.mxu0 0.0
    %793 = vmatpush1.msra.mxu0 %v40
    %794 = vmatprep.subr.mxu0 0.0
    %795 = vmatpush2.msra.mxu0 0.0
    %796 = vmatprep.subr.mxu0 0.0
    %797 = vmatpush2.msra.mxu0 0.0
    %798 = vmatprep.subr.mxu0 0.0
    %799 = vmatpush2.msra.mxu0 0.0
    %800 = vmatprep.subr.mxu0 0.0
    %801 = vmatpush2.msra.mxu0 0.0
    %802 = vmatprep.subr.mxu0 0.0
    %803 = vmatpush2.msra.mxu0 0.0
    %804 = vmatprep.subr.mxu0 0.0
    %805 = vmatpush2.msra.mxu0 0.0
    %806 = vmatprep.subr.mxu0 0.0
    %807 = vmatpush2.msra.mxu0 0.0
    %808 = vmatprep.subr.mxu0 0.0
    %809 = vmatpush2.msra.mxu0 0.0
    %810 = vmatprep.subr.mxu0 0.0
    %811 = vmatpush2.msra.mxu0 0.0
    %812 = vmatprep.subr.mxu0 0.0
    %813 = vmatpush2.msra.mxu0 0.0
    %814 = vmatprep.subr.mxu0 0.0
    %815 = vmatpush2.msra.mxu0 0.0
    %816 = vmatprep.subr.mxu0 0.0
    %817 = vmatpush2.msra.mxu0 0.0
    %818 = vmatprep.subr.mxu0 0.0
    %819 = vmatpush2.msra.mxu0 0.0
    %820 = vmatprep.subr.mxu0 0.0
    %821 = vmatpush2.msra.mxu0 0.0
    %822 = vmatprep.subr.mxu0 0.0
    %823 = vmatpush2.msra.mxu0 0.0
    %824 = vmatprep.subr.mxu0 0.0
    %825 = vmatpush2.msra.mxu0 0.0
    %826 = vmatprep.mubr.f32.mxu0 0.0
    %827 = vmatmul.mubr.f32.gmra.mxu0 %v760
    %v828 = vpop.f32.mrf.mxu0
    %v829 = vadd.f32 0.0, %v828
    %v830 = vpop.f32.mrf.mxu0
    %831 = vdwg.mxu0
    %v832 = vadd.f32 %v756, %v829
    %v833 = vxor.u32 %v832, 2147483648
    %v834 = vmul.f32 %v833, 1.442695
    %v835 = vpow.pop %v834
    %v836 = vadd.f32 %v835, 1.0
    %v837 = vrcp.pop %v836
    %v838 = vmul.f32 1.0, %v837
    %v839 = vtanh.pop %v832
    %v840 = vmul.f32 %v838, %v748
    %842 = vrot.lane.b32.xlu0 %v839, 32
    %v843 = vpop.permute.xlu0 %842
    %v845 = vmul.f32 %v838, %v843
    %847 = vrot.lane.b32.xlu0 %v845, 32
    %v848 = vpop.permute.xlu0 %847
    %v850 = vadd.f32 %v840, %v848
    %v851 = vtanh.pop %v850
    %853 = vrot.lane.b32.xlu0 %v851, 32
    %v854 = vpop.permute.xlu0 %853
    %v856 = vmul.f32 %v838, %v854
    %v857 = vld [vmem:[%s3] sm:$0xff]
    %v858 = vld [vmem:[%s3 + $0x8] sm:$0xff]
    %v859 = vld [vmem:[%s3 + $0x10] sm:$0xff]
    %v860 = vld [vmem:[%s3 + $0x18] sm:$0xff]
    %v861 = vld [vmem:[%s2] sm:$0xff]
    %v862 = vld [vmem:[%s4] sm:$0x7]
    %vm863 = vcmask 23552
    %v865 = vsel %vm863, %v861, 0
    %vm867 = vcmask 1042432
    %v869 = vsel %vm867, %v862, 0
    %871 = vmatprep.subr.mxu0 0.0
    %872 = vmatpush1.msra.mxu0 0.0
    %873 = vmatprep.subr.mxu0 0.0
    %874 = vmatpush1.msra.mxu0 0.0
    %875 = vmatprep.subr.mxu0 0.0
    %876 = vmatpush1.msra.mxu0 0.0
    %877 = vmatprep.subr.mxu0 0.0
    %878 = vmatpush1.msra.mxu0 0.0
    %879 = vmatprep.subr.mxu0 0.0
    %880 = vmatpush1.msra.mxu0 0.0
    %881 = vmatprep.subr.mxu0 0.0
    %882 = vmatpush1.msra.mxu0 0.0
    %883 = vmatprep.subr.mxu0 0.0
    %884 = vmatpush1.msra.mxu0 0.0
    %885 = vmatprep.subr.mxu0 0.0
    %886 = vmatpush1.msra.mxu0 0.0
    %887 = vmatprep.subr.mxu0 0.0
    %888 = vmatpush1.msra.mxu0 0.0
    %889 = vmatprep.subr.mxu0 0.0
    %890 = vmatpush1.msra.mxu0 0.0
    %891 = vmatprep.subr.mxu0 0.0
    %892 = vmatpush1.msra.mxu0 0.0
    %893 = vmatprep.subr.mxu0 0.0
    %894 = vmatpush1.msra.mxu0 0.0
    %895 = vmatprep.subr.mxu0 0.0
    %896 = vmatpush1.msra.mxu0 0.0
    %897 = vmatprep.subr.mxu0 0.0
    %898 = vmatpush1.msra.mxu0 0.0
    %899 = vmatprep.subr.mxu0 0.0
    %900 = vmatpush1.msra.mxu0 0.0
    %901 = vmatprep.subr.mxu0 0.0
    %902 = vmatpush1.msra.mxu0 %v869
    %903 = vmatprep.subr.mxu0 0.0
    %904 = vmatpush2.msra.mxu0 0.0
    %905 = vmatprep.subr.mxu0 0.0
    %906 = vmatpush2.msra.mxu0 0.0
    %907 = vmatprep.subr.mxu0 0.0
    %908 = vmatpush2.msra.mxu0 0.0
    %909 = vmatprep.subr.mxu0 0.0
    %910 = vmatpush2.msra.mxu0 0.0
    %911 = vmatprep.subr.mxu0 0.0
    %912 = vmatpush2.msra.mxu0 0.0
    %913 = vmatprep.subr.mxu0 0.0
    %914 = vmatpush2.msra.mxu0 0.0
    %915 = vmatprep.subr.mxu0 0.0
    %916 = vmatpush2.msra.mxu0 0.0
    %917 = vmatprep.subr.mxu0 0.0
    %918 = vmatpush2.msra.mxu0 0.0
    %919 = vmatprep.subr.mxu0 0.0
    %920 = vmatpush2.msra.mxu0 0.0
    %921 = vmatprep.subr.mxu0 0.0
    %922 = vmatpush2.msra.mxu0 0.0
    %923 = vmatprep.subr.mxu0 0.0
    %924 = vmatpush2.msra.mxu0 0.0
    %925 = vmatprep.subr.mxu0 0.0
    %926 = vmatpush2.msra.mxu0 0.0
    %927 = vmatprep.subr.mxu0 0.0
    %928 = vmatpush2.msra.mxu0 0.0
    %929 = vmatprep.subr.mxu0 0.0
    %930 = vmatpush2.msra.mxu0 0.0
    %931 = vmatprep.subr.mxu0 0.0
    %932 = vmatpush2.msra.mxu0 0.0
    %933 = vmatprep.subr.mxu0 0.0
    %934 = vmatpush2.msra.mxu0 0.0
    %935 = vmatprep.mubr.f32.mxu0 0.0
    %936 = vmatmul.mubr.f32.gmra.mxu0 %v865
    %v937 = vpop.f32.mrf.mxu0
    %v938 = vadd.f32 0.0, %v937
    %v939 = vpop.f32.mrf.mxu0
    %940 = vdwg.mxu0
    %942 = vrot.lane.b32.xlu0 %v856, 64
    %v943 = vpop.permute.xlu0 %942
    %v944 = vsel %vm44, %v943, 0
    %946 = vmatprep.subr.mxu0 0.0
    %947 = vmatpush1.msra.mxu0 0.0
    %948 = vmatprep.subr.mxu0 0.0
    %949 = vmatpush1.msra.mxu0 0.0
    %950 = vmatprep.subr.mxu0 0.0
    %951 = vmatpush1.msra.mxu0 0.0
    %952 = vmatprep.subr.mxu0 0.0
    %953 = vmatpush1.msra.mxu0 0.0
    %954 = vmatprep.subr.mxu0 0.0
    %955 = vmatpush1.msra.mxu0 0.0
    %956 = vmatprep.subr.mxu0 0.0
    %957 = vmatpush1.msra.mxu0 0.0
    %958 = vmatprep.subr.mxu0 0.0
    %959 = vmatpush1.msra.mxu0 0.0
    %960 = vmatprep.subr.mxu0 0.0
    %961 = vmatpush1.msra.mxu0 0.0
    %962 = vmatprep.subr.mxu0 0.0
    %963 = vmatpush1.msra.mxu0 0.0
    %964 = vmatprep.subr.mxu0 0.0
    %965 = vmatpush1.msra.mxu0 0.0
    %966 = vmatprep.subr.mxu0 0.0
    %967 = vmatpush1.msra.mxu0 0.0
    %968 = vmatprep.subr.mxu0 0.0
    %969 = vmatpush1.msra.mxu0 0.0
    %970 = vmatprep.subr.mxu0 0.0
    %971 = vmatpush1.msra.mxu0 %v860
    %972 = vmatprep.subr.mxu0 0.0
    %973 = vmatpush1.msra.mxu0 %v859
    %974 = vmatprep.subr.mxu0 0.0
    %975 = vmatpush1.msra.mxu0 %v858
    %976 = vmatprep.subr.mxu0 0.0
    %977 = vmatpush1.msra.mxu0 %v857
    %978 = vmatprep.subr.mxu0 0.0
    %979 = vmatpush2.msra.mxu0 0.0
    %980 = vmatprep.subr.mxu0 0.0
    %981 = vmatpush2.msra.mxu0 0.0
    %982 = vmatprep.subr.mxu0 0.0
    %983 = vmatpush2.msra.mxu0 0.0
    %984 = vmatprep.subr.mxu0 0.0
    %985 = vmatpush2.msra.mxu0 0.0
    %986 = vmatprep.subr.mxu0 0.0
    %987 = vmatpush2.msra.mxu0 0.0
    %988 = vmatprep.subr.mxu0 0.0
    %989 = vmatpush2.msra.mxu0 0.0
    %990 = vmatprep.subr.mxu0 0.0
    %991 = vmatpush2.msra.mxu0 0.0
    %992 = vmatprep.subr.mxu0 0.0
    %993 = vmatpush2.msra.mxu0 0.0
    %994 = vmatprep.subr.mxu0 0.0
    %995 = vmatpush2.msra.mxu0 0.0
    %996 = vmatprep.subr.mxu0 0.0
    %997 = vmatpush2.msra.mxu0 0.0
    %998 = vmatprep.subr.mxu0 0.0
    %999 = vmatpush2.msra.mxu0 0.0
    %1000 = vmatprep.subr.mxu0 0.0
    %1001 = vmatpush2.msra.mxu0 0.0
    %1002 = vmatprep.subr.mxu0 0.0
    %1003 = vmatpush2.msra.mxu0 0.0
    %1004 = vmatprep.subr.mxu0 0.0
    %1005 = vmatpush2.msra.mxu0 0.0
    %1006 = vmatprep.subr.mxu0 0.0
    %1007 = vmatpush2.msra.mxu0 0.0
    %1008 = vmatprep.subr.mxu0 0.0
    %1009 = vmatpush2.msra.mxu0 0.0
    %1010 = vmatprep.mubr.f32.mxu0 0.0
    %1011 = vmatmul.mubr.f32.gmra.mxu0 %v944
    %v1012 = vpop.f32.mrf.mxu0
    %v1013 = vadd.f32 %v938, %v1012
    %v1014 = vpop.f32.mrf.mxu0
    %1015 = vdwg.mxu0
    %v1016 = vld [vmem:[#allocation2] sm:$0x1]
    %v1018 = vlaneseq
    %v1019 = vshrl.u32 %v1018, 7
    %v1020 = vsub.s32 0, %v1019
    %v1021 = vrot.slane %v1016, %v1020
    %v1023 = vadd.f32 %v1013, %v1021
    %v1024 = vxor.u32 %v1023, 2147483648
    %v1025 = vmul.f32 %v1024, 1.442695
    %v1026 = vpow.pop %v1025
    %v1027 = vadd.f32 %v1026, 1.0
    %v1028 = vrcp.pop %v1027
    %v1029 = vmul.f32 1.0, %v1028
    %vm1030 = vcmask 7168
    %1031 = vst.msk [vmem:[%s6] sm:$0xff] %vm1030, %v1029
    // Predicated region
    $region30: #{tpu_custom_call.1} parent=1 // pred_check
      _
    $region31: #{tpu_custom_call.1} parent=1 // pred_check_branch
      %1033 = sbr.rel (0) target = $region33
    $region32: #{tpu_custom_call.1} parent=1 // pred_region
      _
    $region33: #{tpu_custom_call.1} parent=1 // pred_fallthru
      _
    // Predicated region
    $region34: #{tpu_custom_call.1} parent=1 // pred_check
      _
    $region35: #{tpu_custom_call.1} parent=1 // pred_check_branch
      %1035 = sbr.rel (0) target = $region37
    $region36: #{tpu_custom_call.1} parent=1 // pred_region
      _
    $region37: #{tpu_custom_call.1} parent=1 // pred_fallthru
      _
    %1036 = vsyncpa [#allocation4], 1

</llo_original>
